<compile_context>
chip_gen: v7x
topology: tpu7x:2x2x1
jax: 0.10.0
libtpu: 0.0.40
codegen_flags: <defaults>
</compile_context>

<pallas_src>
import jax
import jax.numpy as jnp
from jax.experimental import pallas as pl
from jax.experimental.pallas import tpu as pltpu


# ---------------------------------------------------------------------------
# Kernel
# ---------------------------------------------------------------------------
def mlp_kernel(x_ref, w1_ref, b1_ref, w2_ref, b2_ref, w3_ref, b3_ref, o_ref):
    """One lane tile of the grouped layout.

    x_ref : (G*10, TL) bf16   -- G batch groups stacked along sublanes
    o_ref : (G,   TL) f32     -- sigmoid outputs, one row per group
    Weights are block-diagonal so a single MXU pass serves all G groups.
    """
    x = x_ref[...]                                                    # bf16

    # Layer 1: (G*16, G*10) @ (G*10, TL) -> (G*16, TL); f32 accumulate.
    h1 = jnp.dot(w1_ref[...], x, preferred_element_type=jnp.float32) + b1_ref[...]
    h1 = jnp.maximum(h1, 0.0).astype(jnp.bfloat16)

    # Layer 2: (G*16, G*16) @ (G*16, TL) -> (G*16, TL)
    h2 = jnp.dot(w2_ref[...], h1, preferred_element_type=jnp.float32) + b2_ref[...]
    h2 = jnp.maximum(h2, 0.0).astype(jnp.bfloat16)

    # Layer 3: (G, G*16) @ (G*16, TL) -> (G, TL); scalar bias broadcast.
    logits = jnp.dot(w3_ref[...], h2, preferred_element_type=jnp.float32) + b3_ref[...]

    # Numerically stable sigmoid (sign-split): exp argument <= 0, never
    # overflows; exp and the approximate reciprocal both use the EUP slot and
    # the reciprocal only ever sees values in (1, 2].
    z = jnp.exp(-jnp.abs(logits))
    pos = pl.reciprocal(1.0 + z, approx=True)          # sigmoid(|logits|)
    o_ref[...] = jnp.where(logits >= 0.0, pos, 1.0 - pos).astype(o_ref.dtype)


# ---------------------------------------------------------------------------
# Wrapper
# ---------------------------------------------------------------------------
def _round_up(v, m):
    return (v + m - 1) // m * m


def _cdiv(a, b):
    return (a + b - 1) // b


def _block_diag(w, g):
    """(out, in) -> (g*out, g*in) with w on the diagonal blocks."""
    out_d, in_d = w.shape
    eye = jnp.eye(g, dtype=w.dtype)
    return (eye[:, None, :, None] * w[None, :, None, :]).reshape(g * out_d, g * in_d)


def _default_group_count():
    """Group count that fills the MXU: 16x16=256 rows (v6e/v7x), 8x16=128 (v4/v5)."""
    try:
        kind = jax.devices()[0].device_kind.lower()
    except Exception:
        return 8
    return 16 if ("v6" in kind or "v7" in kind) else 8


def sequential_nn_forward(x, params, *, group_count=None, tile_lanes_max=2048):
    """x: [B, 10] float32.  params: PyTorch-layout weights (out,in) / biases (out,)."""
    B, F = x.shape
    assert F == 10
    G = group_count if group_count is not None else _default_group_count()

    w1, b1 = params["w1"], params["b1"]   # (16,10), (16,)
    w2, b2 = params["w2"], params["b2"]   # (16,16), (16,)
    w3, b3 = params["w3"], params["b3"]   # (1,16),  (1,)
    H1, H2 = w1.shape[0], w2.shape[0]

    # --- Tiling: lanes-per-group is a 128-multiple; always >= 2 grid tiles so
    # both v7x TensorCores get work; tile capped to keep VMEM small while
    # amortizing the ~0.35us per-step overhead. ---
    lanes_per_group = _round_up(max(_cdiv(B, G), 1), 128)
    n_tiles = max(2, _cdiv(lanes_per_group, tile_lanes_max))
    tile_lanes = _round_up(_cdiv(lanes_per_group, n_tiles), 128)
    lanes_per_group = n_tiles * tile_lanes
    Bp = G * lanes_per_group

    # --- Grouped batch-in-lanes relayout of x: one fused XLA pass
    # (pad + reshape + transpose + bf16 cast).  Row g*F+f, column c holds
    # feature f of batch element g*lanes_per_group + c. ---
    x_pad = jnp.pad(x, ((0, Bp - B), (0, 0)))
    x_g = (x_pad.reshape(G, lanes_per_group, F)
                .transpose(0, 2, 1)
                .reshape(G * F, lanes_per_group)
                .astype(jnp.bfloat16))

    # --- Block-diagonal weights (bf16, VMEM-resident) and tiled f32 biases. ---
    w1_bd = _block_diag(w1, G).astype(jnp.bfloat16)            # (G*16, G*10)
    w2_bd = _block_diag(w2, G).astype(jnp.bfloat16)            # (G*16, G*16)
    w3_bd = _block_diag(w3, G).astype(jnp.bfloat16)            # (G,    G*16)
    b1_g = jnp.tile(b1, G).reshape(G * H1, 1).astype(jnp.float32)
    b2_g = jnp.tile(b2, G).reshape(G * H2, 1).astype(jnp.float32)
    b3_c = b3.reshape(1, 1).astype(jnp.float32)

    # Same block every grid step -> stays resident in VMEM (DMA'd once).
    def resident(arr):
        return pl.BlockSpec(arr.shape, lambda i: (0, 0))

    out = pl.pallas_call(
        mlp_kernel,
        out_shape=jax.ShapeDtypeStruct((G, lanes_per_group), jnp.float32),
        grid_spec=pltpu.PrefetchScalarGridSpec(
            num_scalar_prefetch=0,
            grid=(n_tiles,),
            in_specs=[
                # x lane-tile (pipelined / double-buffered).  If xprof shows
                # exposed DMA on v7x, add pipeline_mode=pl.Buffered(3) here.
                pl.BlockSpec((G * F, tile_lanes), lambda i: (0, i)),
                resident(w1_bd), resident(b1_g),
                resident(w2_bd), resident(b2_g),
                resident(w3_bd), resident(b3_c),
            ],
            out_specs=pl.BlockSpec((G, tile_lanes), lambda i: (0, i)),
        ),
        compiler_params=pltpu.CompilerParams(
            dimension_semantics=("parallel",),
        ),
    )(x_g, w1_bd, b1_g, w2_bd, b2_g, w3_bd, b3_c)

    # (G, lanes) row-major is exactly batch order; strip padding -> (B, 1).
    return out.reshape(Bp, 1)[:B]


# ---------------------------------------------------------------------------
# Reference / demo
# ---------------------------------------------------------------------------
def init_params(key):
    """PyTorch nn.Linear default init: uniform(-1/sqrt(fan_in), 1/sqrt(fan_in)).
    Weights kept in PyTorch (out, in) layout; biases as (out,)."""
    def linear(k, fan_in, fan_out):
        kw, kb = jax.random.split(k)
        bound = 1.0 / jnp.sqrt(jnp.float32(fan_in))
        w = jax.random.uniform(kw, (fan_out, fan_in), jnp.float32, -bound, bound)
        b = jax.random.uniform(kb, (fan_out,), jnp.float32, -bound, bound)
        return w, b

    k1, k2, k3 = jax.random.split(key, 3)
    w1, b1 = linear(k1, 10, 16)
    w2, b2 = linear(k2, 16, 16)
    w3, b3 = linear(k3, 16, 1)
    return {"w1": w1, "b1": b1, "w2": w2, "b2": b2, "w3": w3, "b3": b3}


def reference_forward(x, params):
    h1 = jnp.maximum(x @ params["w1"].T + params["b1"], 0.0)
    h2 = jnp.maximum(h1 @ params["w2"].T + params["b2"], 0.0)
    return jax.nn.sigmoid(h2 @ params["w3"].T + params["b3"])


if __name__ == "__main__":
    key = jax.random.PRNGKey(0)
    kx, kp = jax.random.split(key)

    B = 300  # small demo batch spanning >1 group; forward takes [B, 10]
    x = jax.random.normal(kx, (B, 10), dtype=jnp.float32) * 3.0
    params = init_params(kp)

    out = sequential_nn_forward(x, params)
    jax.block_until_ready(out)

    ref = reference_forward(x, params)
    assert out.shape == (B, 1), out.shape
    # bf16 weight/input transfer + approx reciprocal -> loose but safe tolerance.
    assert jnp.allclose(out, ref, atol=2e-2, rtol=2e-2), jnp.max(jnp.abs(out - ref))

    print("KERNEL_OK")
</pallas_src>

<mosaic_0001>
module attributes {stable_mosaic.version = 11 : i64} {
  func.func @mlp_kernel(%arg0: i32, %arg1: memref<80x128xbf16, #tpu.memory_space<vmem>>, %arg2: memref<128x80xbf16, #tpu.memory_space<vmem>>, %arg3: memref<128x1xf32, #tpu.memory_space<vmem>>, %arg4: memref<128x128xbf16, #tpu.memory_space<vmem>>, %arg5: memref<128x1xf32, #tpu.memory_space<vmem>>, %arg6: memref<8x128xbf16, #tpu.memory_space<vmem>>, %arg7: memref<1x1xf32, #tpu.memory_space<vmem>>, %arg8: memref<8x128xf32, #tpu.memory_space<vmem>>) attributes {dimension_semantics = [#tpu.dimension_semantics<parallel>], iteration_bounds = array<i64: 2>, scalar_prefetch = 0 : i64, scratch_operands = 0 : i64, tpu.core_type = #tpu.core_type<tc>, window_params = [{transform_indices = @transform_0, window_bounds = array<i64: 80, 128>}, {pipeline_mode = #tpu.pipeline_mode<synchronous>, transform_indices = @transform_1, window_bounds = array<i64: 128, 80>}, {pipeline_mode = #tpu.pipeline_mode<synchronous>, transform_indices = @transform_2, window_bounds = array<i64: 128, 1>}, {pipeline_mode = #tpu.pipeline_mode<synchronous>, transform_indices = @transform_3, window_bounds = array<i64: 128, 128>}, {pipeline_mode = #tpu.pipeline_mode<synchronous>, transform_indices = @transform_4, window_bounds = array<i64: 128, 1>}, {pipeline_mode = #tpu.pipeline_mode<synchronous>, transform_indices = @transform_5, window_bounds = array<i64: 8, 128>}, {pipeline_mode = #tpu.pipeline_mode<synchronous>, transform_indices = @transform_6, window_bounds = array<i64: 1, 1>}, {transform_indices = @transform_7, window_bounds = array<i64: 8, 128>}]} {
    %c0 = arith.constant 0 : index
    %c0_0 = arith.constant 0 : index
    %0 = vector.load %arg1[%c0, %c0_0] : memref<80x128xbf16, #tpu.memory_space<vmem>>, vector<80x128xbf16>
    %c0_1 = arith.constant 0 : index
    %c0_2 = arith.constant 0 : index
    %1 = vector.load %arg2[%c0_1, %c0_2] : memref<128x80xbf16, #tpu.memory_space<vmem>>, vector<128x80xbf16>
    %cst = arith.constant dense<0.000000e+00> : vector<128x128xf32>
    %2 = tpu.matmul %1, %0, %cst {dimension_numbers = #tpu.dot_dimension_numbers<[1], [0], [0], [1], [0, 0, 1, 1], [], []>} : vector<128x80xbf16>, vector<80x128xbf16>, vector<128x128xf32> -> vector<128x128xf32>
    %c0_3 = arith.constant 0 : index
    %c0_4 = arith.constant 0 : index
    %3 = vector.load %arg3[%c0_3, %c0_4] : memref<128x1xf32, #tpu.memory_space<vmem>>, vector<128x1xf32>
    %4 = vector.broadcast %3 : vector<128x1xf32> to vector<128x128xf32>
    %5 = arith.addf %2, %4 : vector<128x128xf32>
    %cst_5 = arith.constant 0.000000e+00 : f32
    %6 = vector.broadcast %cst_5 : f32 to vector<128x128xf32>
    %7 = arith.maximumf %5, %6 : vector<128x128xf32>
    %8 = arith.truncf %7 : vector<128x128xf32> to vector<128x128xbf16>
    %c0_6 = arith.constant 0 : index
    %c0_7 = arith.constant 0 : index
    %9 = vector.load %arg4[%c0_6, %c0_7] : memref<128x128xbf16, #tpu.memory_space<vmem>>, vector<128x128xbf16>
    %cst_8 = arith.constant dense<0.000000e+00> : vector<128x128xf32>
    %10 = tpu.matmul %9, %8, %cst_8 {dimension_numbers = #tpu.dot_dimension_numbers<[1], [0], [0], [1], [0, 0, 1, 1], [], []>} : vector<128x128xbf16>, vector<128x128xbf16>, vector<128x128xf32> -> vector<128x128xf32>
    %c0_9 = arith.constant 0 : index
    %c0_10 = arith.constant 0 : index
    %11 = vector.load %arg5[%c0_9, %c0_10] : memref<128x1xf32, #tpu.memory_space<vmem>>, vector<128x1xf32>
    %12 = vector.broadcast %11 : vector<128x1xf32> to vector<128x128xf32>
    %13 = arith.addf %10, %12 : vector<128x128xf32>
    %cst_11 = arith.constant 0.000000e+00 : f32
    %14 = vector.broadcast %cst_11 : f32 to vector<128x128xf32>
    %15 = arith.maximumf %13, %14 : vector<128x128xf32>
    %16 = arith.truncf %15 : vector<128x128xf32> to vector<128x128xbf16>
    %c0_12 = arith.constant 0 : index
    %c0_13 = arith.constant 0 : index
    %17 = vector.load %arg6[%c0_12, %c0_13] : memref<8x128xbf16, #tpu.memory_space<vmem>>, vector<8x128xbf16>
    %cst_14 = arith.constant dense<0.000000e+00> : vector<8x128xf32>
    %18 = tpu.matmul %17, %16, %cst_14 {dimension_numbers = #tpu.dot_dimension_numbers<[1], [0], [0], [1], [0, 0, 1, 1], [], []>} : vector<8x128xbf16>, vector<128x128xbf16>, vector<8x128xf32> -> vector<8x128xf32>
    %c0_15 = arith.constant 0 : index
    %c0_16 = arith.constant 0 : index
    %19 = vector.load %arg7[%c0_15, %c0_16] : memref<1x1xf32, #tpu.memory_space<vmem>>, vector<1x1xf32>
    %20 = vector.broadcast %19 : vector<1x1xf32> to vector<8x128xf32>
    %21 = arith.addf %18, %20 : vector<8x128xf32>
    %22 = math.absf %21 : vector<8x128xf32>
    %cst_17 = arith.constant 0.000000e+00 : f32
    %23 = vector.broadcast %cst_17 : f32 to vector<8x128xf32>
    %24 = arith.subf %23, %22 : vector<8x128xf32>
    %25 = math.exp %24 : vector<8x128xf32>
    %cst_18 = arith.constant 1.000000e+00 : f32
    %26 = vector.broadcast %cst_18 : f32 to vector<8x128xf32>
    %27 = arith.addf %26, %25 : vector<8x128xf32>
    %28 = tpu.reciprocal %27 {approx = true} : vector<8x128xf32> -> vector<8x128xf32>
    %cst_19 = arith.constant 0.000000e+00 : f32
    %29 = vector.broadcast %cst_19 : f32 to vector<8x128xf32>
    %30 = arith.cmpf oge, %21, %29 : vector<8x128xf32>
    %cst_20 = arith.constant 1.000000e+00 : f32
    %31 = vector.broadcast %cst_20 : f32 to vector<8x128xf32>
    %32 = arith.subf %31, %28 : vector<8x128xf32>
    %33 = arith.select %30, %28, %32 : vector<8x128xi1>, vector<8x128xf32>
    %c0_21 = arith.constant 0 : index
    %c0_22 = arith.constant 0 : index
    %34 = vector.load %arg8[%c0_21, %c0_22] : memref<8x128xf32, #tpu.memory_space<vmem>>, vector<8x128xf32>
    tpu.vector_store %arg8[%c0_21, %c0_22], %33 {strides = array<i32>} : memref<8x128xf32, #tpu.memory_space<vmem>>, vector<8x128xf32>,
    return
  }
  func.func @transform_0(%arg0: i32) -> (i32, i32) {
    %c0_i32 = arith.constant 0 : i32
    %c0_i32_0 = arith.constant 0 : i32
    return %c0_i32, %arg0 : i32, i32
  }
  func.func @transform_1(%arg0: i32) -> (i32, i32) {
    %c0_i32 = arith.constant 0 : i32
    %c0_i32_0 = arith.constant 0 : i32
    %c0_i32_1 = arith.constant 0 : i32
    return %c0_i32, %c0_i32_0 : i32, i32
  }
  func.func @transform_2(%arg0: i32) -> (i32, i32) {
    %c0_i32 = arith.constant 0 : i32
    %c0_i32_0 = arith.constant 0 : i32
    %c0_i32_1 = arith.constant 0 : i32
    return %c0_i32, %c0_i32_0 : i32, i32
  }
  func.func @transform_3(%arg0: i32) -> (i32, i32) {
    %c0_i32 = arith.constant 0 : i32
    %c0_i32_0 = arith.constant 0 : i32
    %c0_i32_1 = arith.constant 0 : i32
    return %c0_i32, %c0_i32_0 : i32, i32
  }
  func.func @transform_4(%arg0: i32) -> (i32, i32) {
    %c0_i32 = arith.constant 0 : i32
    %c0_i32_0 = arith.constant 0 : i32
    %c0_i32_1 = arith.constant 0 : i32
    return %c0_i32, %c0_i32_0 : i32, i32
  }
  func.func @transform_5(%arg0: i32) -> (i32, i32) {
    %c0_i32 = arith.constant 0 : i32
    %c0_i32_0 = arith.constant 0 : i32
    %c0_i32_1 = arith.constant 0 : i32
    return %c0_i32, %c0_i32_0 : i32, i32
  }
  func.func @transform_6(%arg0: i32) -> (i32, i32) {
    %c0_i32 = arith.constant 0 : i32
    %c0_i32_0 = arith.constant 0 : i32
    %c0_i32_1 = arith.constant 0 : i32
    return %c0_i32, %c0_i32_0 : i32, i32
  }
  func.func @transform_7(%arg0: i32) -> (i32, i32) {
    %c0_i32 = arith.constant 0 : i32
    %c0_i32_0 = arith.constant 0 : i32
    return %c0_i32, %arg0 : i32, i32
  }
}

</mosaic_0001>

<llo_original>
// kernel: tpu_custom_call.1
$region0: #{tpu_custom_call.1}
  #allocation0 [shape = 'u32[]', space=smem, size = 0x4, offset = 0x4, fixed_abs, tag = 'smem constant byte address 0x4 - core index']
  #allocation1 [shape = 'u32[144,128]{1,0:T(1,128)}', space=vmem, size = 0x12000, scoped, tag = 'internal scratch']
  #allocation2 [shape = 'f32[1,1]{1,0:T(1,128)S(1)}', space=vmem, size = 0x200, scoped, tag = 'scoped memory for tpu_custom_call.1']
  %s0 = inlined_call_operand.vmem [shape: bf16[80,256], index: 0, kind: input, shape index: {}]
  %s1 = inlined_call_operand.vmem [shape: bf16[128,80], index: 1, kind: input, shape index: {}]
  %s2 = inlined_call_operand.vmem [shape: f32[128,1], index: 2, kind: input, shape index: {}]
  %s3 = inlined_call_operand.vmem [shape: bf16[128,128], index: 3, kind: input, shape index: {}]
  %s4 = inlined_call_operand.vmem [shape: f32[128,1], index: 4, kind: input, shape index: {}]
  %s5 = inlined_call_operand.vmem [shape: bf16[8,128], index: 5, kind: input, shape index: {}]
  %s6 = inlined_call_operand.<no memory space> [shape: f32[1,1], index: 6, kind: input, shape index: {}]
  %s7 = inlined_call_operand.hbm [shape: f32[8,256], index: 7, kind: output, shape index: {}]
  %s8 = sld [smem:[#allocation0]]
  $region102: #{tpu_custom_call.1} parent=0
    _
  %s10 = ssub.s32 1, %s8
  %s11 = scalar_select 0, %s10, %s8
  %v12 = vstv %s6
  %13 = vst [vmem:[#allocation2] sm:$0x1] %v12
  $region1: #{tpu_custom_call.1} parent=0
    #allocation3 [shape = 'u8[40960]{0}', space=vmem, size = 0xa000, scoped, tag = 'input window, operand 0']
    #allocation4 [shape = 'u8[8192]{0}', space=vmem, size = 0x2000, scoped, tag = 'output window, operand 0']
    #allocation5 [shape = 's32[2]{0}', space=sflag, size = 0x8, scoped, tag = 'scoped memory for tpu_custom_call.1']
    %14 = vsyncpa [#allocation5], 0
    %s15 = scalar_lea.sflag [#allocation5], 1
    %16 = vsyncpa %s15, 0
    loop: start=0, step=1, limit=4
    $region2: #{tpu_custom_call.1} parent=1 // loop_pre_header
      _
    $region3: #{tpu_custom_call.1} parent=1 // loop_header
      %s18 = sphi 0, %s22
      %p19 = scmp.ge.s32.totalorder %s18, 4
      %s28 = sphi 0, %s30
      %s31 = sphi 0, %s28
      %s32 = sphi 0, %s31
      %s48 = sphi 0, %s32
      %s52 = sphi 0, %s52
      %s54 = sphi 0, %s52
      %s55 = sphi 0, %s54
      %s69 = sphi 0, %s55
      %s73 = sphi 0, %s73
      %s75 = sphi 0, %s73
      %s76 = sphi 0, %s75
      %s90 = sphi 0, %s76
      %s94 = sphi 0, %s94
      %s96 = sphi 0, %s94
      %s97 = sphi 0, %s96
      %s111 = sphi 0, %s97
      %s115 = sphi 0, %s115
      %s117 = sphi 0, %s115
      %s118 = sphi 0, %s117
      %s132 = sphi 0, %s118
      %s136 = sphi 0, %s136
      %s138 = sphi 0, %s136
      %s139 = sphi 0, %s138
      %s153 = sphi 0, %s139
      %s157 = sphi 0, %s157
      %s159 = sphi 0, %s157
      %s160 = sphi 0, %s159
      %s174 = sphi 0, %s160
      %s180 = sphi 0, %s182
      %s183 = sphi 0, %s180
      %s184 = sphi 0, %s183
      %s200 = sphi 0, %s184
    $region4: #{tpu_custom_call.1} parent=1 // loop_header_branch
      %21 = sbr.rel (%p19) target = $region8
    $region5: #{tpu_custom_call.1} parent=1 // loop_body
      %s23 = ssub.s32 %s18, 1
      %s24 = ssub.s32 %s18, 2
      %s25 = sadd.s32 %s18, 1
      %s26 = ssub.s32 %s18, %s25
      %p27 = scmp.eq.s32.totalorder %s26, 0
      %s29 = sadd.s32 %s28, 1
      %s30 = scalar_select %p27, %s28, %s29
      %p33 = pneg %p27
      %p34 = scmp.eq.s32.totalorder %s18, 1
      %p35 = por %p33, %p34
      %p36 = scmp.ne.s32.totalorder %s28, %s31
      %p37 = scmp.eq.s32.totalorder %s18, 0
      %p38 = por %p36, %p37
      %p39 = scmp.ne.s32.totalorder %s28, %s31
      %p40 = scmp.eq.s32.totalorder %s23, 1
      %p41 = por %p39, %p40
      %p42 = scmp.ne.s32.totalorder %s31, %s32
      %p43 = scmp.eq.s32.totalorder %s23, 0
      %p44 = por %p42, %p43
      %p45 = scmp.ne.s32.totalorder %s31, %s32
      %p46 = scmp.eq.s32.totalorder %s24, 1
      %p47 = por %p45, %p46
      %p49 = scmp.ne.s32.totalorder %s32, %s48
      %p50 = scmp.eq.s32.totalorder %s24, 0
      %p51 = por %p49, %p50
      %s53 = sadd.s32 %s52, 1
      %p56 = scmp.eq.s32.totalorder %s18, 1
      %p57 = scmp.ne.s32.totalorder %s52, %s54
      %p58 = scmp.eq.s32.totalorder %s18, 0
      %p59 = por %p57, %p58
      %p60 = scmp.ne.s32.totalorder %s52, %s54
      %p61 = scmp.eq.s32.totalorder %s23, 1
      %p62 = por %p60, %p61
      %p63 = scmp.ne.s32.totalorder %s54, %s55
      %p64 = scmp.eq.s32.totalorder %s23, 0
      %p65 = por %p63, %p64
      %p66 = scmp.ne.s32.totalorder %s54, %s55
      %p67 = scmp.eq.s32.totalorder %s24, 1
      %p68 = por %p66, %p67
      %p70 = scmp.ne.s32.totalorder %s55, %s69
      %p71 = scmp.eq.s32.totalorder %s24, 0
      %p72 = por %p70, %p71
      %s74 = sadd.s32 %s73, 1
      %p77 = scmp.eq.s32.totalorder %s18, 1
      %p78 = scmp.ne.s32.totalorder %s73, %s75
      %p79 = scmp.eq.s32.totalorder %s18, 0
      %p80 = por %p78, %p79
      %p81 = scmp.ne.s32.totalorder %s73, %s75
      %p82 = scmp.eq.s32.totalorder %s23, 1
      %p83 = por %p81, %p82
      %p84 = scmp.ne.s32.totalorder %s75, %s76
      %p85 = scmp.eq.s32.totalorder %s23, 0
      %p86 = por %p84, %p85
      %p87 = scmp.ne.s32.totalorder %s75, %s76
      %p88 = scmp.eq.s32.totalorder %s24, 1
      %p89 = por %p87, %p88
      %p91 = scmp.ne.s32.totalorder %s76, %s90
      %p92 = scmp.eq.s32.totalorder %s24, 0
      %p93 = por %p91, %p92
      %s95 = sadd.s32 %s94, 1
      %p98 = scmp.eq.s32.totalorder %s18, 1
      %p99 = scmp.ne.s32.totalorder %s94, %s96
      %p100 = scmp.eq.s32.totalorder %s18, 0
      %p101 = por %p99, %p100
      %p102 = scmp.ne.s32.totalorder %s94, %s96
      %p103 = scmp.eq.s32.totalorder %s23, 1
      %p104 = por %p102, %p103
      %p105 = scmp.ne.s32.totalorder %s96, %s97
      %p106 = scmp.eq.s32.totalorder %s23, 0
      %p107 = por %p105, %p106
      %p108 = scmp.ne.s32.totalorder %s96, %s97
      %p109 = scmp.eq.s32.totalorder %s24, 1
      %p110 = por %p108, %p109
      %p112 = scmp.ne.s32.totalorder %s97, %s111
      %p113 = scmp.eq.s32.totalorder %s24, 0
      %p114 = por %p112, %p113
      %s116 = sadd.s32 %s115, 1
      %p119 = scmp.eq.s32.totalorder %s18, 1
      %p120 = scmp.ne.s32.totalorder %s115, %s117
      %p121 = scmp.eq.s32.totalorder %s18, 0
      %p122 = por %p120, %p121
      %p123 = scmp.ne.s32.totalorder %s115, %s117
      %p124 = scmp.eq.s32.totalorder %s23, 1
      %p125 = por %p123, %p124
      %p126 = scmp.ne.s32.totalorder %s117, %s118
      %p127 = scmp.eq.s32.totalorder %s23, 0
      %p128 = por %p126, %p127
      %p129 = scmp.ne.s32.totalorder %s117, %s118
      %p130 = scmp.eq.s32.totalorder %s24, 1
      %p131 = por %p129, %p130
      %p133 = scmp.ne.s32.totalorder %s118, %s132
      %p134 = scmp.eq.s32.totalorder %s24, 0
      %p135 = por %p133, %p134
      %s137 = sadd.s32 %s136, 1
      %p140 = scmp.eq.s32.totalorder %s18, 1
      %p141 = scmp.ne.s32.totalorder %s136, %s138
      %p142 = scmp.eq.s32.totalorder %s18, 0
      %p143 = por %p141, %p142
      %p144 = scmp.ne.s32.totalorder %s136, %s138
      %p145 = scmp.eq.s32.totalorder %s23, 1
      %p146 = por %p144, %p145
      %p147 = scmp.ne.s32.totalorder %s138, %s139
      %p148 = scmp.eq.s32.totalorder %s23, 0
      %p149 = por %p147, %p148
      %p150 = scmp.ne.s32.totalorder %s138, %s139
      %p151 = scmp.eq.s32.totalorder %s24, 1
      %p152 = por %p150, %p151
      %p154 = scmp.ne.s32.totalorder %s139, %s153
      %p155 = scmp.eq.s32.totalorder %s24, 0
      %p156 = por %p154, %p155
      %s158 = sadd.s32 %s157, 1
      %p161 = scmp.eq.s32.totalorder %s18, 1
      %p162 = scmp.ne.s32.totalorder %s157, %s159
      %p163 = scmp.eq.s32.totalorder %s18, 0
      %p164 = por %p162, %p163
      %p165 = scmp.ne.s32.totalorder %s157, %s159
      %p166 = scmp.eq.s32.totalorder %s23, 1
      %p167 = por %p165, %p166
      %p168 = scmp.ne.s32.totalorder %s159, %s160
      %p169 = scmp.eq.s32.totalorder %s23, 0
      %p170 = por %p168, %p169
      %p171 = scmp.ne.s32.totalorder %s159, %s160
      %p172 = scmp.eq.s32.totalorder %s24, 1
      %p173 = por %p171, %p172
      %p175 = scmp.ne.s32.totalorder %s160, %s174
      %p176 = scmp.eq.s32.totalorder %s24, 0
      %p177 = por %p175, %p176
      %s178 = ssub.s32 %s18, %s25
      %p179 = scmp.eq.s32.totalorder %s178, 0
      %s181 = sadd.s32 %s180, 1
      %s182 = scalar_select %p179, %s180, %s181
      %p185 = pneg %p179
      %p186 = scmp.eq.s32.totalorder %s18, 1
      %p187 = por %p185, %p186
      %p188 = scmp.ne.s32.totalorder %s180, %s183
      %p189 = scmp.eq.s32.totalorder %s18, 0
      %p190 = por %p188, %p189
      %p191 = scmp.ne.s32.totalorder %s180, %s183
      %p192 = scmp.eq.s32.totalorder %s23, 1
      %p193 = por %p191, %p192
      %p194 = scmp.ne.s32.totalorder %s183, %s184
      %p195 = scmp.eq.s32.totalorder %s23, 0
      %p196 = por %p194, %p195
      %p197 = scmp.ne.s32.totalorder %s183, %s184
      %p198 = scmp.eq.s32.totalorder %s24, 1
      %p199 = por %p197, %p198
      %p201 = scmp.ne.s32.totalorder %s184, %s200
      %p202 = scmp.eq.s32.totalorder %s24, 0
      %p203 = por %p201, %p202
      %p204 = scmp.le.s32.totalorder 1, %s18
      %p205 = scmp.lt.s32.totalorder %s18, 3
      %p206 = pnand %p204, %p205
      %p207 = pneg %p206
      // Predicated region
      $region9: #{tpu_custom_call.1} parent=5 // pred_check
        _
      $region10: #{tpu_custom_call.1} parent=5 // pred_check_branch
        %209 = sbr.rel (%p206) target = $region12
      $region11: #{tpu_custom_call.1} parent=5 // pred_region
        %s210 = ssub.s32 %s18, 1
        // Predicated region
        $region13: #{tpu_custom_call.1} parent=11 // pred_check
          %p211 = pneg %p65
        $region14: #{tpu_custom_call.1} parent=11 // pred_check_branch
          %213 = sbr.rel (%p211) target = $region16
        $region15: #{tpu_custom_call.1} parent=11 // pred_region
          _
        $region16: #{tpu_custom_call.1} parent=11 // pred_fallthru
          _
        // Predicated region
        $region17: #{tpu_custom_call.1} parent=11 // pred_check
          %p214 = pneg %p86
        $region18: #{tpu_custom_call.1} parent=11 // pred_check_branch
          %216 = sbr.rel (%p214) target = $region20
        $region19: #{tpu_custom_call.1} parent=11 // pred_region
          _
        $region20: #{tpu_custom_call.1} parent=11 // pred_fallthru
          _
        // Predicated region
        $region21: #{tpu_custom_call.1} parent=11 // pred_check
          %p217 = pneg %p107
        $region22: #{tpu_custom_call.1} parent=11 // pred_check_branch
          %219 = sbr.rel (%p217) target = $region24
        $region23: #{tpu_custom_call.1} parent=11 // pred_region
          _
        $region24: #{tpu_custom_call.1} parent=11 // pred_fallthru
          _
        // Predicated region
        $region25: #{tpu_custom_call.1} parent=11 // pred_check
          %p220 = pneg %p128
        $region26: #{tpu_custom_call.1} parent=11 // pred_check_branch
          %222 = sbr.rel (%p220) target = $region28
        $region27: #{tpu_custom_call.1} parent=11 // pred_region
          _
        $region28: #{tpu_custom_call.1} parent=11 // pred_fallthru
          _
        // Predicated region
        $region29: #{tpu_custom_call.1} parent=11 // pred_check
          %p223 = pneg %p149
        $region30: #{tpu_custom_call.1} parent=11 // pred_check_branch
          %225 = sbr.rel (%p223) target = $region32
        $region31: #{tpu_custom_call.1} parent=11 // pred_region
          _
        $region32: #{tpu_custom_call.1} parent=11 // pred_fallthru
          _
        // Predicated region
        $region33: #{tpu_custom_call.1} parent=11 // pred_check
          %p226 = pneg %p170
        $region34: #{tpu_custom_call.1} parent=11 // pred_check_branch
          %228 = sbr.rel (%p226) target = $region36
        $region35: #{tpu_custom_call.1} parent=11 // pred_region
          _
        $region36: #{tpu_custom_call.1} parent=11 // pred_fallthru
          _
      $region12: #{tpu_custom_call.1} parent=5 // pred_fallthru
        _
      %p229 = scmp.lt.s32.totalorder %s18, 2
      // Predicated region
      $region37: #{tpu_custom_call.1} parent=5 // pred_check
        %p230 = pneg %p229
      $region38: #{tpu_custom_call.1} parent=5 // pred_check_branch
        %232 = sbr.rel (%p230) target = $region40
      $region39: #{tpu_custom_call.1} parent=5 // pred_region
        // Predicated region
        $region41: #{tpu_custom_call.1} parent=39 // pred_check
          %p233 = pneg %p38
        $region42: #{tpu_custom_call.1} parent=39 // pred_check_branch
          %235 = sbr.rel (%p233) target = $region44
        $region43: #{tpu_custom_call.1} parent=39 // pred_region
          %s236 = sand.u32 %s28, 1
          %s237 = sand.u32 %s28, 1
          %s238 = smul.addr %s237, 40
          %s239 = scalar_lea.vmem [#allocation3], %s238
          %s240 = smul.addr %s18, 4
          %s241 = scalar_lea.vmem %s0, %s240
          // Predicated region
          $region45: #{tpu_custom_call.1} parent=43 // pred_check
            _
          $region46: #{tpu_custom_call.1} parent=43 // pred_check_branch
            %243 = sbr.rel (0) target = $region48
          $region47: #{tpu_custom_call.1} parent=43 // pred_region
            // Predicated region
            $region49: #{tpu_custom_call.1} parent=47 // pred_check
              _
            $region50: #{tpu_custom_call.1} parent=47 // pred_check_branch
              %245 = sbr.rel target = $region52
            $region51: #{tpu_custom_call.1} parent=47 // pred_region
              // Predicated region
              $region64: #{tpu_custom_call.1} parent=51 // pred_check
                _
              $region65: #{tpu_custom_call.1} parent=51 // pred_check_branch
                %278 = sbr.rel (0) target = $region67
              $region66: #{tpu_custom_call.1} parent=51 // pred_region
                loop: start=0, step=1, limit=1
                $region68: #{tpu_custom_call.1} parent=66 // loop_pre_header
                  _
                $region69: #{tpu_custom_call.1} parent=66 // loop_header
                  %s280 = sphi 0, %s284
                  %p281 = scmp.ge.s32.totalorder %s280, 1
                  %s285 = sphi %s241, %s241
                  %s286 = sphi %s239, %s239
                $region70: #{tpu_custom_call.1} parent=66 // loop_header_branch
                  %283 = sbr.rel (%p281) target = $region74
                $region71: #{tpu_custom_call.1} parent=66 // loop_body
                  _
                $region72: #{tpu_custom_call.1} parent=66 // loop_footer
                  %s284 = sadd.s32 1, %s280
                $region73: #{tpu_custom_call.1} parent=66 // loop_footer_branch
                  %279 = sbr.rel target = $region69
                $region74: #{tpu_custom_call.1} parent=66 // loop_exit
                  _
                loop: start=0, step=1, limit=1
                $region75: #{tpu_custom_call.1} parent=66 // loop_pre_header
                  _
                $region76: #{tpu_custom_call.1} parent=66 // loop_header
                  %s289 = sphi 0, %s293
                  %p290 = scmp.ge.s32.totalorder %s289, 1
                  %s294 = sphi %s241, %s241
                  %s295 = sphi %s239, %s239
                $region77: #{tpu_custom_call.1} parent=66 // loop_header_branch
                  %292 = sbr.rel (%p290) target = $region81
                $region78: #{tpu_custom_call.1} parent=66 // loop_body
                  %v296 = vld [vmem:[%s294] sm:$0xf]
                  %297 = vst [vmem:[%s295] sm:$0xf] %v296
                  %v298 = vld [vmem:[%s294 + $0x8] sm:$0xf]
                  %299 = vst [vmem:[%s295 + $0x4] sm:$0xf] %v298
                  %v300 = vld [vmem:[%s294 + $0x10] sm:$0xf]
                  %301 = vst [vmem:[%s295 + $0x8] sm:$0xf] %v300
                  %v302 = vld [vmem:[%s294 + $0x18] sm:$0xf]
                  %303 = vst [vmem:[%s295 + $0xc] sm:$0xf] %v302
                  %v304 = vld [vmem:[%s294 + $0x20] sm:$0xf]
                  %305 = vst [vmem:[%s295 + $0x10] sm:$0xf] %v304
                  %v306 = vld [vmem:[%s294 + $0x28] sm:$0xf]
                  %307 = vst [vmem:[%s295 + $0x14] sm:$0xf] %v306
                  %v308 = vld [vmem:[%s294 + $0x30] sm:$0xf]
                  %309 = vst [vmem:[%s295 + $0x18] sm:$0xf] %v308
                  %v310 = vld [vmem:[%s294 + $0x38] sm:$0xf]
                  %311 = vst [vmem:[%s295 + $0x1c] sm:$0xf] %v310
                  %v312 = vld [vmem:[%s294 + $0x40] sm:$0xf]
                  %313 = vst [vmem:[%s295 + $0x20] sm:$0xf] %v312
                  %v314 = vld [vmem:[%s294 + $0x48] sm:$0xf]
                  %315 = vst [vmem:[%s295 + $0x24] sm:$0xf] %v314
                $region79: #{tpu_custom_call.1} parent=66 // loop_footer
                  %s293 = sadd.s32 1, %s289
                $region80: #{tpu_custom_call.1} parent=66 // loop_footer_branch
                  %288 = sbr.rel target = $region76
                $region81: #{tpu_custom_call.1} parent=66 // loop_exit
                  _
              $region67: #{tpu_custom_call.1} parent=51 // pred_fallthru
                _
            $region52: #{tpu_custom_call.1} parent=47 // pred_fallthru
              _
            // Predicated region
            $region53: #{tpu_custom_call.1} parent=47 // pred_check
              _
            $region54: #{tpu_custom_call.1} parent=47 // pred_check_branch
              %247 = sbr.rel (0) target = $region56
            $region55: #{tpu_custom_call.1} parent=47 // pred_region
              loop: start=0, step=1, limit=1
              $region57: #{tpu_custom_call.1} parent=55 // loop_pre_header
                _
              $region58: #{tpu_custom_call.1} parent=55 // loop_header
                %s250 = sphi 0, %s254
                %p251 = scmp.ge.s32.totalorder %s250, 1
                %s255 = sphi %s241, %s241
                %s256 = sphi %s239, %s239
              $region59: #{tpu_custom_call.1} parent=55 // loop_header_branch
                %253 = sbr.rel (%p251) target = $region63
              $region60: #{tpu_custom_call.1} parent=55 // loop_body
                %v257 = vld [vmem:[%s255] sm:$0xf]
                %258 = vst [vmem:[%s256] sm:$0xf] %v257
                %v259 = vld [vmem:[%s255 + $0x8] sm:$0xf]
                %260 = vst [vmem:[%s256 + $0x4] sm:$0xf] %v259
                %v261 = vld [vmem:[%s255 + $0x10] sm:$0xf]
                %262 = vst [vmem:[%s256 + $0x8] sm:$0xf] %v261
                %v263 = vld [vmem:[%s255 + $0x18] sm:$0xf]
                %264 = vst [vmem:[%s256 + $0xc] sm:$0xf] %v263
                %v265 = vld [vmem:[%s255 + $0x20] sm:$0xf]
                %266 = vst [vmem:[%s256 + $0x10] sm:$0xf] %v265
                %v267 = vld [vmem:[%s255 + $0x28] sm:$0xf]
                %268 = vst [vmem:[%s256 + $0x14] sm:$0xf] %v267
                %v269 = vld [vmem:[%s255 + $0x30] sm:$0xf]
                %270 = vst [vmem:[%s256 + $0x18] sm:$0xf] %v269
                %v271 = vld [vmem:[%s255 + $0x38] sm:$0xf]
                %272 = vst [vmem:[%s256 + $0x1c] sm:$0xf] %v271
                %v273 = vld [vmem:[%s255 + $0x40] sm:$0xf]
                %274 = vst [vmem:[%s256 + $0x20] sm:$0xf] %v273
                %v275 = vld [vmem:[%s255 + $0x48] sm:$0xf]
                %276 = vst [vmem:[%s256 + $0x24] sm:$0xf] %v275
              $region61: #{tpu_custom_call.1} parent=55 // loop_footer
                %s254 = sadd.s32 1, %s250
              $region62: #{tpu_custom_call.1} parent=55 // loop_footer_branch
                %249 = sbr.rel target = $region58
              $region63: #{tpu_custom_call.1} parent=55 // loop_exit
                _
            $region56: #{tpu_custom_call.1} parent=47 // pred_fallthru
              _
          $region48: #{tpu_custom_call.1} parent=43 // pred_fallthru
            _
          %316 = vnop
        $region44: #{tpu_custom_call.1} parent=39 // pred_fallthru
          _
      $region40: #{tpu_custom_call.1} parent=5 // pred_fallthru
        _
      %p317 = scmp.le.s32.totalorder 1, %s18
      %p318 = scmp.lt.s32.totalorder %s18, 3
      %p319 = pnand %p317, %p318
      %p320 = pneg %p319
      // Predicated region
      $region82: #{tpu_custom_call.1} parent=5 // pred_check
        _
      $region83: #{tpu_custom_call.1} parent=5 // pred_check_branch
        %322 = sbr.rel (%p319) target = $region85
      $region84: #{tpu_custom_call.1} parent=5 // pred_region
        %s323 = ssub.s32 %s18, 1
        %s324 = sand.u32 %s31, 1
        %s325 = sand.u32 %s31, 1
        %s326 = smul.addr %s325, 40
        %s327 = scalar_lea.vmem [#allocation3], %s326
        // Predicated region
        $region86: #{tpu_custom_call.1} parent=84 // pred_check
          %p328 = pneg %p44
        $region87: #{tpu_custom_call.1} parent=84 // pred_check_branch
          %330 = sbr.rel (%p328) target = $region89
        $region88: #{tpu_custom_call.1} parent=84 // pred_region
          _
        $region89: #{tpu_custom_call.1} parent=84 // pred_fallthru
          _
        %s331 = sand.u32 %s31, 1
        %s332 = sand.u32 %s31, 1
        %s333 = smul.addr %s332, 40
        %s334 = scalar_lea.vmem [#allocation3], %s333
        %p335 = pneg %p44
        %p336 = pneg %p41
        %p337 = pneg %p65
        %p338 = pneg %p62
        %p339 = pneg %p86
        %p340 = pneg %p83
        %p341 = pneg %p107
        %p342 = pneg %p104
        %p343 = pneg %p128
        %p344 = pneg %p125
        %p345 = pneg %p149
        %p346 = pneg %p146
        %p347 = pneg %p170
        %p348 = pneg %p167
        %p349 = pneg %p196
        %p350 = pneg %p193
        %s351 = sand.u32 %s183, 1
        %s352 = scalar_lea.sflag [#allocation5], %s351
        %s353 = sand.u32 %s183, 1
        %s354 = smul.addr %s353, 8
        %s355 = scalar_lea.vmem [#allocation4], %s354
        %v357 = vld [vmem:[%s327] sm:$0xf]
        %v358 = vld [vmem:[%s327 + $0x4] sm:$0xf]
        %v359 = vld [vmem:[%s327 + $0x8] sm:$0xf]
        %v360 = vld [vmem:[%s327 + $0xc] sm:$0xf]
        %v361 = vld [vmem:[%s327 + $0x10] sm:$0xf]
        %v362 = vld [vmem:[%s327 + $0x14] sm:$0xf]
        %v363 = vld [vmem:[%s327 + $0x18] sm:$0xf]
        %v364 = vld [vmem:[%s327 + $0x1c] sm:$0xf]
        %v365 = vld [vmem:[%s327 + $0x20] sm:$0xf]
        %v366 = vld [vmem:[%s327 + $0x24] sm:$0xf]
        %v367 = vld [vmem:[%s1] sm:$0xf]
        %v368 = vld [vmem:[%s1 + $0x4] sm:$0xf]
        %v369 = vld [vmem:[%s1 + $0x8] sm:$0xf]
        %v370 = vld [vmem:[%s1 + $0xc] sm:$0xf]
        %v371 = vld [vmem:[%s1 + $0x10] sm:$0xf]
        %v372 = vld [vmem:[%s1 + $0x14] sm:$0xf]
        %v373 = vld [vmem:[%s1 + $0x18] sm:$0xf]
        %v374 = vld [vmem:[%s1 + $0x1c] sm:$0xf]
        %v375 = vld [vmem:[%s1 + $0x20] sm:$0xf]
        %v376 = vld [vmem:[%s1 + $0x24] sm:$0xf]
        %v377 = vld [vmem:[%s1 + $0x28] sm:$0xf]
        %v378 = vld [vmem:[%s1 + $0x2c] sm:$0xf]
        %v379 = vld [vmem:[%s1 + $0x30] sm:$0xf]
        %v380 = vld [vmem:[%s1 + $0x34] sm:$0xf]
        %v381 = vld [vmem:[%s1 + $0x38] sm:$0xf]
        %v382 = vld [vmem:[%s1 + $0x3c] sm:$0xf]
        %v383 = vld [vmem:[%s2] sm:$0xff]
        %v384 = vld [vmem:[%s2 + $0x8] sm:$0xff]
        %v385 = vld [vmem:[%s2 + $0x10] sm:$0xff]
        %v386 = vld [vmem:[%s2 + $0x18] sm:$0xff]
        %v387 = vld [vmem:[%s2 + $0x20] sm:$0xff]
        %v388 = vld [vmem:[%s2 + $0x28] sm:$0xff]
        %v389 = vld [vmem:[%s2 + $0x30] sm:$0xff]
        %v390 = vld [vmem:[%s2 + $0x38] sm:$0xff]
        %v391 = vld [vmem:[%s2 + $0x40] sm:$0xff]
        %v392 = vld [vmem:[%s2 + $0x48] sm:$0xff]
        %v393 = vld [vmem:[%s2 + $0x50] sm:$0xff]
        %v394 = vld [vmem:[%s2 + $0x58] sm:$0xff]
        %v395 = vld [vmem:[%s2 + $0x60] sm:$0xff]
        %v396 = vld [vmem:[%s2 + $0x68] sm:$0xff]
        %v397 = vld [vmem:[%s2 + $0x70] sm:$0xff]
        %v398 = vld [vmem:[%s2 + $0x78] sm:$0xff]
        %400 = vset.pattern.permute.xlu0 0
        %401 = vperm.xlu0 %400, %v383
        %v402 = vpop.permute.xlu0 %401
        %405 = vset.pattern.permute.xlu0 0
        %406 = vperm.xlu0 %405, %v384
        %v407 = vpop.permute.xlu0 %406
        %410 = vset.pattern.permute.xlu0 0
        %411 = vperm.xlu0 %410, %v385
        %v412 = vpop.permute.xlu0 %411
        %415 = vset.pattern.permute.xlu0 0
        %416 = vperm.xlu0 %415, %v386
        %v417 = vpop.permute.xlu0 %416
        %420 = vset.pattern.permute.xlu0 0
        %421 = vperm.xlu0 %420, %v387
        %v422 = vpop.permute.xlu0 %421
        %425 = vset.pattern.permute.xlu0 0
        %426 = vperm.xlu0 %425, %v388
        %v427 = vpop.permute.xlu0 %426
        %430 = vset.pattern.permute.xlu0 0
        %431 = vperm.xlu0 %430, %v389
        %v432 = vpop.permute.xlu0 %431
        %435 = vset.pattern.permute.xlu0 0
        %436 = vperm.xlu0 %435, %v390
        %v437 = vpop.permute.xlu0 %436
        %440 = vset.pattern.permute.xlu0 0
        %441 = vperm.xlu0 %440, %v391
        %v442 = vpop.permute.xlu0 %441
        %445 = vset.pattern.permute.xlu0 0
        %446 = vperm.xlu0 %445, %v392
        %v447 = vpop.permute.xlu0 %446
        %450 = vset.pattern.permute.xlu0 0
        %451 = vperm.xlu0 %450, %v393
        %v452 = vpop.permute.xlu0 %451
        %455 = vset.pattern.permute.xlu0 0
        %456 = vperm.xlu0 %455, %v394
        %v457 = vpop.permute.xlu0 %456
        %460 = vset.pattern.permute.xlu0 0
        %461 = vperm.xlu0 %460, %v395
        %v462 = vpop.permute.xlu0 %461
        %465 = vset.pattern.permute.xlu0 0
        %466 = vperm.xlu0 %465, %v396
        %v467 = vpop.permute.xlu0 %466
        %470 = vset.pattern.permute.xlu0 0
        %471 = vperm.xlu0 %470, %v397
        %v472 = vpop.permute.xlu0 %471
        %475 = vset.pattern.permute.xlu0 0
        %476 = vperm.xlu0 %475, %v398
        %v477 = vpop.permute.xlu0 %476
        %v495 = vunpack.c.l.b16 %v367
        %v496 = vunpack.c.l.b16 %v368
        %v497 = vunpack.c.l.b16 %v369
        %v498 = vunpack.c.l.b16 %v370
        %v499 = vunpack.c.l.b16 %v371
        %v500 = vunpack.c.l.b16 %v372
        %v501 = vunpack.c.l.b16 %v373
        %v502 = vunpack.c.l.b16 %v374
        %v503 = vunpack.c.l.b16 %v375
        %v504 = vunpack.c.l.b16 %v376
        %v505 = vunpack.c.l.b16 %v377
        %v506 = vunpack.c.l.b16 %v378
        %v507 = vunpack.c.l.b16 %v379
        %v508 = vunpack.c.l.b16 %v380
        %v509 = vunpack.c.l.b16 %v381
        %v510 = vunpack.c.l.b16 %v382
        %v511 = vpack.c.b16 %v496, %v495
        %v512 = vpack.c.b16 %v498, %v497
        %v513 = vpack.c.b16 %v500, %v499
        %v514 = vpack.c.b16 %v502, %v501
        %v515 = vpack.c.b16 %v504, %v503
        %v516 = vpack.c.b16 %v506, %v505
        %v517 = vpack.c.b16 %v508, %v507
        %v518 = vpack.c.b16 %v510, %v509
        %v529 = vunpack.c.l.b16 %v357
        %v530 = vunpack.c.l.b16 %v358
        %v531 = vunpack.c.l.b16 %v359
        %v532 = vunpack.c.l.b16 %v360
        %v533 = vunpack.c.l.b16 %v361
        %v534 = vunpack.c.l.b16 %v362
        %v535 = vunpack.c.l.b16 %v363
        %v536 = vunpack.c.l.b16 %v364
        %v537 = vunpack.c.l.b16 %v365
        %v538 = vunpack.c.l.b16 %v366
        %v539 = vpack.c.b16 %v530, %v529
        %v540 = vpack.c.b16 %v532, %v531
        %v541 = vpack.c.b16 %v534, %v533
        %v542 = vpack.c.b16 %v536, %v535
        %v543 = vpack.c.b16 %v538, %v537
        %vm549 = vcmask 654336
        %v551 = vsel %vm549, %v511, 0
        %v554 = vsel %vm549, %v512, 0
        %v557 = vsel %vm549, %v513, 0
        %v560 = vsel %vm549, %v514, 0
        %v563 = vsel %vm549, %v515, 0
        %v566 = vsel %vm549, %v516, 0
        %v569 = vsel %vm549, %v517, 0
        %v572 = vsel %vm549, %v518, 0
        %574 = vmatprep.subr.bf16.mxu0 0
        %575 = vmatpush1.bf16.msra.mxu0 %v539
        %576 = vmatprep.subr.bf16.mxu0 0
        %577 = vmatpush1.bf16.msra.mxu0 %v540
        %578 = vmatprep.subr.bf16.mxu0 0
        %579 = vmatpush1.bf16.msra.mxu0 %v541
        %580 = vmatprep.subr.bf16.mxu0 0
        %581 = vmatpush1.bf16.msra.mxu0 %v542
        %582 = vmatprep.subr.bf16.mxu0 0
        %583 = vmatpush1.bf16.msra.mxu0 %v543
        %584 = vmatprep.subr.bf16.mxu0 0
        %585 = vmatpush1.bf16.msra.mxu0 0
        %586 = vmatprep.subr.bf16.mxu0 0
        %587 = vmatpush1.bf16.msra.mxu0 0
        %588 = vmatprep.subr.bf16.mxu0 0
        %589 = vmatpush1.bf16.msra.mxu0 0
        %590 = vmatprep.subr.bf16.mxu0 0
        %591 = vmatpush1.bf16.msra.mxu0 0
        %592 = vmatprep.subr.bf16.mxu0 0
        %593 = vmatpush1.bf16.msra.mxu0 0
        %594 = vmatprep.subr.bf16.mxu0 0
        %595 = vmatpush1.bf16.msra.mxu0 0
        %596 = vmatprep.subr.bf16.mxu0 0
        %597 = vmatpush1.bf16.msra.mxu0 0
        %598 = vmatprep.subr.bf16.mxu0 0
        %599 = vmatpush1.bf16.msra.mxu0 0
        %600 = vmatprep.subr.bf16.mxu0 0
        %601 = vmatpush1.bf16.msra.mxu0 0
        %602 = vmatprep.subr.bf16.mxu0 0
        %603 = vmatpush1.bf16.msra.mxu0 0
        %604 = vmatprep.subr.bf16.mxu0 0
        %605 = vmatpush1.bf16.msra.mxu0 0
        %606 = vmatprep.mubr.bf16.mxu0 0
        %607 = vmatmul.mubr.bf16.gmra.mrb[0].mxu0 %v551
        %v608 = vpop.f32.mrb[0].mxu0
        %v609 = vadd.f32 %v402, %v608
        %v610 = vpop.f32.mrb[0].mxu0
        %v611 = vpop.f32.mrb[0].mxu0
        %v612 = vadd.f32 %v407, %v611
        %v613 = vpop.f32.mrb[0].mxu0
        %614 = vmatprep.mubr.bf16.mxu0 0
        %615 = vmatmul.mubr.bf16.gmra.mrb[0].mxu0 %v554
        %v616 = vpop.f32.mrb[0].mxu0
        %v617 = vadd.f32 %v412, %v616
        %v618 = vpop.f32.mrb[0].mxu0
        %v619 = vpop.f32.mrb[0].mxu0
        %v620 = vadd.f32 %v417, %v619
        %v621 = vpop.f32.mrb[0].mxu0
        %622 = vmatprep.mubr.bf16.mxu0 0
        %623 = vmatmul.mubr.bf16.gmra.mrb[0].mxu0 %v557
        %v624 = vpop.f32.mrb[0].mxu0
        %v625 = vadd.f32 %v422, %v624
        %v626 = vpop.f32.mrb[0].mxu0
        %v627 = vpop.f32.mrb[0].mxu0
        %v628 = vadd.f32 %v427, %v627
        %v629 = vpop.f32.mrb[0].mxu0
        %630 = vmatprep.mubr.bf16.mxu0 0
        %631 = vmatmul.mubr.bf16.gmra.mrb[0].mxu0 %v560
        %v632 = vpop.f32.mrb[0].mxu0
        %v633 = vadd.f32 %v432, %v632
        %v634 = vpop.f32.mrb[0].mxu0
        %v635 = vpop.f32.mrb[0].mxu0
        %v636 = vadd.f32 %v437, %v635
        %v637 = vpop.f32.mrb[0].mxu0
        %638 = vmatprep.mubr.bf16.mxu0 0
        %639 = vmatmul.mubr.bf16.gmra.mrb[0].mxu0 %v563
        %v640 = vpop.f32.mrb[0].mxu0
        %v641 = vadd.f32 %v442, %v640
        %v642 = vpop.f32.mrb[0].mxu0
        %v643 = vpop.f32.mrb[0].mxu0
        %v644 = vadd.f32 %v447, %v643
        %v645 = vpop.f32.mrb[0].mxu0
        %646 = vmatprep.mubr.bf16.mxu0 0
        %647 = vmatmul.mubr.bf16.gmra.mrb[0].mxu0 %v566
        %v648 = vpop.f32.mrb[0].mxu0
        %v649 = vadd.f32 %v452, %v648
        %v650 = vpop.f32.mrb[0].mxu0
        %v651 = vpop.f32.mrb[0].mxu0
        %v652 = vadd.f32 %v457, %v651
        %v653 = vpop.f32.mrb[0].mxu0
        %654 = vmatprep.mubr.bf16.mxu0 0
        %655 = vmatmul.mubr.bf16.gmra.mrb[0].mxu0 %v569
        %v656 = vpop.f32.mrb[0].mxu0
        %v657 = vadd.f32 %v462, %v656
        %v658 = vpop.f32.mrb[0].mxu0
        %v659 = vpop.f32.mrb[0].mxu0
        %v660 = vadd.f32 %v467, %v659
        %v661 = vpop.f32.mrb[0].mxu0
        %662 = vmatprep.mubr.bf16.mxu0 0
        %663 = vmatmul.mubr.bf16.gmra.mrb[0].mxu0 %v572
        %v664 = vpop.f32.mrb[0].mxu0
        %v665 = vadd.f32 %v472, %v664
        %v666 = vpop.f32.mrb[0].mxu0
        %v667 = vpop.f32.mrb[0].mxu0
        %v668 = vadd.f32 %v477, %v667
        %v669 = vpop.f32.mrb[0].mxu0
        %670 = vdwg.mxu0
        %v671 = vmax.f32 %v609, 0.0
        %v672 = vmax.f32 %v612, 0.0
        %v673 = vmax.f32 %v617, 0.0
        %v674 = vmax.f32 %v620, 0.0
        %v675 = vmax.f32 %v625, 0.0
        %v676 = vmax.f32 %v628, 0.0
        %v677 = vmax.f32 %v633, 0.0
        %v678 = vmax.f32 %v636, 0.0
        %v679 = vmax.f32 %v641, 0.0
        %v680 = vmax.f32 %v644, 0.0
        %v681 = vmax.f32 %v649, 0.0
        %v682 = vmax.f32 %v652, 0.0
        %v683 = vmax.f32 %v657, 0.0
        %v684 = vmax.f32 %v660, 0.0
        %v685 = vmax.f32 %v665, 0.0
        %v686 = vmax.f32 %v668, 0.0
        %v687 = vpack.c.bf16 %v672, %v671
        %v688 = vpack.c.bf16 %v674, %v673
        %v689 = vpack.c.bf16 %v676, %v675
        %v690 = vpack.c.bf16 %v678, %v677
        %v691 = vpack.c.bf16 %v680, %v679
        %v692 = vpack.c.bf16 %v682, %v681
        %v693 = vpack.c.bf16 %v684, %v683
        %v694 = vpack.c.bf16 %v686, %v685
        %v695 = vld [vmem:[%s3] sm:$0xf]
        %v696 = vld [vmem:[%s3 + $0x4] sm:$0xf]
        %v697 = vld [vmem:[%s3 + $0x8] sm:$0xf]
        %v698 = vld [vmem:[%s3 + $0xc] sm:$0xf]
        %v699 = vld [vmem:[%s3 + $0x10] sm:$0xf]
        %v700 = vld [vmem:[%s3 + $0x14] sm:$0xf]
        %v701 = vld [vmem:[%s3 + $0x18] sm:$0xf]
        %v702 = vld [vmem:[%s3 + $0x1c] sm:$0xf]
        %v703 = vld [vmem:[%s3 + $0x20] sm:$0xf]
        %v704 = vld [vmem:[%s3 + $0x24] sm:$0xf]
        %v705 = vld [vmem:[%s3 + $0x28] sm:$0xf]
        %v706 = vld [vmem:[%s3 + $0x2c] sm:$0xf]
        %v707 = vld [vmem:[%s3 + $0x30] sm:$0xf]
        %v708 = vld [vmem:[%s3 + $0x34] sm:$0xf]
        %v709 = vld [vmem:[%s3 + $0x38] sm:$0xf]
        %v710 = vld [vmem:[%s3 + $0x3c] sm:$0xf]
        %v711 = vld [vmem:[%s4] sm:$0xff]
        %v712 = vld [vmem:[%s4 + $0x8] sm:$0xff]
        %v713 = vld [vmem:[%s4 + $0x10] sm:$0xff]
        %v714 = vld [vmem:[%s4 + $0x18] sm:$0xff]
        %v715 = vld [vmem:[%s4 + $0x20] sm:$0xff]
        %v716 = vld [vmem:[%s4 + $0x28] sm:$0xff]
        %v717 = vld [vmem:[%s4 + $0x30] sm:$0xff]
        %v718 = vld [vmem:[%s4 + $0x38] sm:$0xff]
        %v719 = vld [vmem:[%s4 + $0x40] sm:$0xff]
        %v720 = vld [vmem:[%s4 + $0x48] sm:$0xff]
        %v721 = vld [vmem:[%s4 + $0x50] sm:$0xff]
        %v722 = vld [vmem:[%s4 + $0x58] sm:$0xff]
        %v723 = vld [vmem:[%s4 + $0x60] sm:$0xff]
        %v724 = vld [vmem:[%s4 + $0x68] sm:$0xff]
        %v725 = vld [vmem:[%s4 + $0x70] sm:$0xff]
        %v726 = vld [vmem:[%s4 + $0x78] sm:$0xff]
        %728 = vset.pattern.permute.xlu0 0
        %729 = vperm.xlu0 %728, %v711
        %v730 = vpop.permute.xlu0 %729
        %733 = vset.pattern.permute.xlu0 0
        %734 = vperm.xlu0 %733, %v712
        %v735 = vpop.permute.xlu0 %734
        %738 = vset.pattern.permute.xlu0 0
        %739 = vperm.xlu0 %738, %v713
        %v740 = vpop.permute.xlu0 %739
        %743 = vset.pattern.permute.xlu0 0
        %744 = vperm.xlu0 %743, %v714
        %v745 = vpop.permute.xlu0 %744
        %748 = vset.pattern.permute.xlu0 0
        %749 = vperm.xlu0 %748, %v715
        %v750 = vpop.permute.xlu0 %749
        %753 = vset.pattern.permute.xlu0 0
        %754 = vperm.xlu0 %753, %v716
        %v755 = vpop.permute.xlu0 %754
        %758 = vset.pattern.permute.xlu0 0
        %759 = vperm.xlu0 %758, %v717
        %v760 = vpop.permute.xlu0 %759
        %763 = vset.pattern.permute.xlu0 0
        %764 = vperm.xlu0 %763, %v718
        %v765 = vpop.permute.xlu0 %764
        %768 = vset.pattern.permute.xlu0 0
        %769 = vperm.xlu0 %768, %v719
        %v770 = vpop.permute.xlu0 %769
        %773 = vset.pattern.permute.xlu0 0
        %774 = vperm.xlu0 %773, %v720
        %v775 = vpop.permute.xlu0 %774
        %778 = vset.pattern.permute.xlu0 0
        %779 = vperm.xlu0 %778, %v721
        %v780 = vpop.permute.xlu0 %779
        %783 = vset.pattern.permute.xlu0 0
        %784 = vperm.xlu0 %783, %v722
        %v785 = vpop.permute.xlu0 %784
        %788 = vset.pattern.permute.xlu0 0
        %789 = vperm.xlu0 %788, %v723
        %v790 = vpop.permute.xlu0 %789
        %793 = vset.pattern.permute.xlu0 0
        %794 = vperm.xlu0 %793, %v724
        %v795 = vpop.permute.xlu0 %794
        %798 = vset.pattern.permute.xlu0 0
        %799 = vperm.xlu0 %798, %v725
        %v800 = vpop.permute.xlu0 %799
        %803 = vset.pattern.permute.xlu0 0
        %804 = vperm.xlu0 %803, %v726
        %v805 = vpop.permute.xlu0 %804
        %v823 = vunpack.c.l.b16 %v695
        %v824 = vunpack.c.l.b16 %v696
        %v825 = vunpack.c.l.b16 %v697
        %v826 = vunpack.c.l.b16 %v698
        %v827 = vunpack.c.l.b16 %v699
        %v828 = vunpack.c.l.b16 %v700
        %v829 = vunpack.c.l.b16 %v701
        %v830 = vunpack.c.l.b16 %v702
        %v831 = vunpack.c.l.b16 %v703
        %v832 = vunpack.c.l.b16 %v704
        %v833 = vunpack.c.l.b16 %v705
        %v834 = vunpack.c.l.b16 %v706
        %v835 = vunpack.c.l.b16 %v707
        %v836 = vunpack.c.l.b16 %v708
        %v837 = vunpack.c.l.b16 %v709
        %v838 = vunpack.c.l.b16 %v710
        %v839 = vpack.c.b16 %v824, %v823
        %v840 = vpack.c.b16 %v826, %v825
        %v841 = vpack.c.b16 %v828, %v827
        %v842 = vpack.c.b16 %v830, %v829
        %v843 = vpack.c.b16 %v832, %v831
        %v844 = vpack.c.b16 %v834, %v833
        %v845 = vpack.c.b16 %v836, %v835
        %v846 = vpack.c.b16 %v838, %v837
        %855 = vmatprep.subr.bf16.mxu0 0
        %856 = vmatpush1.bf16.msra.mxu0 %v687
        %857 = vmatprep.subr.bf16.mxu0 0
        %858 = vmatpush1.bf16.msra.mxu0 %v688
        %859 = vmatprep.subr.bf16.mxu0 0
        %860 = vmatpush1.bf16.msra.mxu0 %v689
        %861 = vmatprep.subr.bf16.mxu0 0
        %862 = vmatpush1.bf16.msra.mxu0 %v690
        %863 = vmatprep.subr.bf16.mxu0 0
        %864 = vmatpush1.bf16.msra.mxu0 %v691
        %865 = vmatprep.subr.bf16.mxu0 0
        %866 = vmatpush1.bf16.msra.mxu0 %v692
        %867 = vmatprep.subr.bf16.mxu0 0
        %868 = vmatpush1.bf16.msra.mxu0 %v693
        %869 = vmatprep.subr.bf16.mxu0 0
        %870 = vmatpush1.bf16.msra.mxu0 %v694
        %871 = vmatprep.subr.bf16.mxu0 0
        %872 = vmatpush1.bf16.msra.mxu0 0
        %873 = vmatprep.subr.bf16.mxu0 0
        %874 = vmatpush1.bf16.msra.mxu0 0
        %875 = vmatprep.subr.bf16.mxu0 0
        %876 = vmatpush1.bf16.msra.mxu0 0
        %877 = vmatprep.subr.bf16.mxu0 0
        %878 = vmatpush1.bf16.msra.mxu0 0
        %879 = vmatprep.subr.bf16.mxu0 0
        %880 = vmatpush1.bf16.msra.mxu0 0
        %881 = vmatprep.subr.bf16.mxu0 0
        %882 = vmatpush1.bf16.msra.mxu0 0
        %883 = vmatprep.subr.bf16.mxu0 0
        %884 = vmatpush1.bf16.msra.mxu0 0
        %885 = vmatprep.subr.bf16.mxu0 0
        %886 = vmatpush1.bf16.msra.mxu0 0
        %887 = vmatprep.mubr.bf16.mxu0 0
        %888 = vmatmul.mubr.bf16.gmra.mrb[0].mxu0 %v839
        %v889 = vpop.f32.mrb[0].mxu0
        %v890 = vadd.f32 %v730, %v889
        %v891 = vpop.f32.mrb[0].mxu0
        %v892 = vpop.f32.mrb[0].mxu0
        %v893 = vadd.f32 %v735, %v892
        %v894 = vpop.f32.mrb[0].mxu0
        %895 = vmatprep.mubr.bf16.mxu0 0
        %896 = vmatmul.mubr.bf16.gmra.mrb[0].mxu0 %v840
        %v897 = vpop.f32.mrb[0].mxu0
        %v898 = vadd.f32 %v740, %v897
        %v899 = vpop.f32.mrb[0].mxu0
        %v900 = vpop.f32.mrb[0].mxu0
        %v901 = vadd.f32 %v745, %v900
        %v902 = vpop.f32.mrb[0].mxu0
        %903 = vmatprep.mubr.bf16.mxu0 0
        %904 = vmatmul.mubr.bf16.gmra.mrb[0].mxu0 %v841
        %v905 = vpop.f32.mrb[0].mxu0
        %v906 = vadd.f32 %v750, %v905
        %v907 = vpop.f32.mrb[0].mxu0
        %v908 = vpop.f32.mrb[0].mxu0
        %v909 = vadd.f32 %v755, %v908
        %v910 = vpop.f32.mrb[0].mxu0
        %911 = vmatprep.mubr.bf16.mxu0 0
        %912 = vmatmul.mubr.bf16.gmra.mrb[0].mxu0 %v842
        %v913 = vpop.f32.mrb[0].mxu0
        %v914 = vadd.f32 %v760, %v913
        %v915 = vpop.f32.mrb[0].mxu0
        %v916 = vpop.f32.mrb[0].mxu0
        %v917 = vadd.f32 %v765, %v916
        %v918 = vpop.f32.mrb[0].mxu0
        %919 = vmatprep.mubr.bf16.mxu0 0
        %920 = vmatmul.mubr.bf16.gmra.mrb[0].mxu0 %v843
        %v921 = vpop.f32.mrb[0].mxu0
        %v922 = vadd.f32 %v770, %v921
        %v923 = vpop.f32.mrb[0].mxu0
        %v924 = vpop.f32.mrb[0].mxu0
        %v925 = vadd.f32 %v775, %v924
        %v926 = vpop.f32.mrb[0].mxu0
        %927 = vmatprep.mubr.bf16.mxu0 0
        %928 = vmatmul.mubr.bf16.gmra.mrb[0].mxu0 %v844
        %v929 = vpop.f32.mrb[0].mxu0
        %v930 = vadd.f32 %v780, %v929
        %v931 = vpop.f32.mrb[0].mxu0
        %v932 = vpop.f32.mrb[0].mxu0
        %v933 = vadd.f32 %v785, %v932
        %v934 = vpop.f32.mrb[0].mxu0
        %935 = vmatprep.mubr.bf16.mxu0 0
        %936 = vmatmul.mubr.bf16.gmra.mrb[0].mxu0 %v845
        %v937 = vpop.f32.mrb[0].mxu0
        %v938 = vadd.f32 %v790, %v937
        %v939 = vpop.f32.mrb[0].mxu0
        %v940 = vpop.f32.mrb[0].mxu0
        %v941 = vadd.f32 %v795, %v940
        %v942 = vpop.f32.mrb[0].mxu0
        %943 = vmatprep.mubr.bf16.mxu0 0
        %944 = vmatmul.mubr.bf16.gmra.mrb[0].mxu0 %v846
        %v945 = vpop.f32.mrb[0].mxu0
        %v946 = vadd.f32 %v800, %v945
        %v947 = vpop.f32.mrb[0].mxu0
        %v948 = vpop.f32.mrb[0].mxu0
        %v949 = vadd.f32 %v805, %v948
        %v950 = vpop.f32.mrb[0].mxu0
        %951 = vdwg.mxu0
        %v952 = vmax.f32 %v890, 0.0
        %v953 = vmax.f32 %v893, 0.0
        %v954 = vmax.f32 %v898, 0.0
        %v955 = vmax.f32 %v901, 0.0
        %v956 = vmax.f32 %v906, 0.0
        %v957 = vmax.f32 %v909, 0.0
        %v958 = vmax.f32 %v914, 0.0
        %v959 = vmax.f32 %v917, 0.0
        %v960 = vmax.f32 %v922, 0.0
        %v961 = vmax.f32 %v925, 0.0
        %v962 = vmax.f32 %v930, 0.0
        %v963 = vmax.f32 %v933, 0.0
        %v964 = vmax.f32 %v938, 0.0
        %v965 = vmax.f32 %v941, 0.0
        %v966 = vmax.f32 %v946, 0.0
        %v967 = vmax.f32 %v949, 0.0
        %v968 = vpack.c.bf16 %v953, %v952
        %v969 = vpack.c.bf16 %v955, %v954
        %v970 = vpack.c.bf16 %v957, %v956
        %v971 = vpack.c.bf16 %v959, %v958
        %v972 = vpack.c.bf16 %v961, %v960
        %v973 = vpack.c.bf16 %v963, %v962
        %v974 = vpack.c.bf16 %v965, %v964
        %v975 = vpack.c.bf16 %v967, %v966
        %v976 = vld [vmem:[%s5] sm:$0xf]
        %v977 = vld [vmem:[#allocation2] sm:$0x1]
        %v979 = vlaneseq
        %v980 = vshrl.u32 %v979, 7
        %v981 = vsub.s32 0, %v980
        %v982 = vrot.slane %v977, %v981
        %983 = vset.pattern.permute.xlu0 0
        %984 = vperm.xlu0 %983, %v982
        %v985 = vpop.permute.xlu0 %984
        %987 = vmatprep.subr.bf16.mxu0 0
        %988 = vmatpush1.bf16.msra.mxu0 %v968
        %989 = vmatprep.subr.bf16.mxu0 0
        %990 = vmatpush1.bf16.msra.mxu0 %v969
        %991 = vmatprep.subr.bf16.mxu0 0
        %992 = vmatpush1.bf16.msra.mxu0 %v970
        %993 = vmatprep.subr.bf16.mxu0 0
        %994 = vmatpush1.bf16.msra.mxu0 %v971
        %995 = vmatprep.subr.bf16.mxu0 0
        %996 = vmatpush1.bf16.msra.mxu0 %v972
        %997 = vmatprep.subr.bf16.mxu0 0
        %998 = vmatpush1.bf16.msra.mxu0 %v973
        %999 = vmatprep.subr.bf16.mxu0 0
        %1000 = vmatpush1.bf16.msra.mxu0 %v974
        %1001 = vmatprep.subr.bf16.mxu0 0
        %1002 = vmatpush1.bf16.msra.mxu0 %v975
        %1003 = vmatprep.subr.bf16.mxu0 0
        %1004 = vmatpush1.bf16.msra.mxu0 0
        %1005 = vmatprep.subr.bf16.mxu0 0
        %1006 = vmatpush1.bf16.msra.mxu0 0
        %1007 = vmatprep.subr.bf16.mxu0 0
        %1008 = vmatpush1.bf16.msra.mxu0 0
        %1009 = vmatprep.subr.bf16.mxu0 0
        %1010 = vmatpush1.bf16.msra.mxu0 0
        %1011 = vmatprep.subr.bf16.mxu0 0
        %1012 = vmatpush1.bf16.msra.mxu0 0
        %1013 = vmatprep.subr.bf16.mxu0 0
        %1014 = vmatpush1.bf16.msra.mxu0 0
        %1015 = vmatprep.subr.bf16.mxu0 0
        %1016 = vmatpush1.bf16.msra.mxu0 0
        %1017 = vmatprep.subr.bf16.mxu0 0
        %1018 = vmatpush1.bf16.msra.mxu0 0
        %1019 = vmatprep.mubr.bf16.mxu0 0
        %1020 = vmatmul.mubr.bf16.gmra.mrb[0].mxu0 %v976
        %v1021 = vpop.f32.mrb[0].mxu0
        %v1022 = vadd.f32 %v985, %v1021
        %v1023 = vpop.f32.mrb[0].mxu0
        %v1024 = vpop.f32.mrb[0].mxu0
        %v1025 = vpop.f32.mrb[0].mxu0
        %1026 = vdwg.mxu0
        %v1027 = vand.u32 2147483647, %v1022
        %v1028 = vsub.f32 0.0, %v1027
        %v1029 = vmul.f32 %v1028, 1.442695
        %v1030 = vpow.pop %v1029
        %v1031 = vadd.f32 %v1030, 1.0
        %v1032 = vrcp.pop %v1031
        %vm1033 = vcmp.ge.f32.partialorder %v1022, 0.0
        %v1034 = vsub.f32 1.0, %v1032
        %v1035 = vsel %vm1033, %v1032, %v1034
        %1036 = vst [vmem:[%s355] sm:$0xff] %v1035
        %s1037 = sand.u32 %s183, 1
        %s1038 = scalar_lea.sflag [#allocation5], %s1037
        %s1039 = sand.u32 %s183, 1
        %s1040 = smul.addr %s1039, 8
        %s1041 = scalar_lea.vmem [#allocation4], %s1040
        // Predicated region
        $region90: #{tpu_custom_call.1} parent=84 // pred_check
          %p1042 = pneg %p193
        $region91: #{tpu_custom_call.1} parent=84 // pred_check_branch
          %1044 = sbr.rel (%p1042) target = $region93
        $region92: #{tpu_custom_call.1} parent=84 // pred_region
          %s1046 = ssub.s32 128, 128
          %1047 = vsyncadd %s1038, %s1046
          %s1048 = smul.addr %s23, 128
          %s1049 = scalar_lea.hbm %s7, %s1048
          %s1051 = sshll.u32 %s1041, 4
          %s1052 = int_to_ptr.vmem [resolvable:$true] %s1051
          %1054 = dma.vmem_to_hbm [thread:$0]  %s1052, 128, %s1049, %s1038
        $region93: #{tpu_custom_call.1} parent=84 // pred_fallthru
          _
      $region85: #{tpu_custom_call.1} parent=5 // pred_fallthru
        _
      %p1055 = scmp.le.s32.totalorder 2, %s18
      // Predicated region
      $region94: #{tpu_custom_call.1} parent=5 // pred_check
        %p1056 = pneg %p1055
      $region95: #{tpu_custom_call.1} parent=5 // pred_check_branch
        %1058 = sbr.rel (%p1056) target = $region97
      $region96: #{tpu_custom_call.1} parent=5 // pred_region
        %s1059 = ssub.s32 %s18, 2
        // Predicated region
        $region98: #{tpu_custom_call.1} parent=96 // pred_check
          %p1060 = pneg %p199
        $region99: #{tpu_custom_call.1} parent=96 // pred_check_branch
          %1062 = sbr.rel (%p1060) target = $region101
        $region100: #{tpu_custom_call.1} parent=96 // pred_region
          %s1063 = sand.u32 %s184, 1
          %s1064 = scalar_lea.sflag [#allocation5], %s1063
          %s1065 = sand.u32 %s184, 1
          %s1066 = smul.addr %s1065, 8
          %s1067 = scalar_lea.vmem [#allocation4], %s1066
          %1068 = dma.done %s1064, 128
        $region101: #{tpu_custom_call.1} parent=96 // pred_fallthru
          _
      $region97: #{tpu_custom_call.1} parent=5 // pred_fallthru
        _
    $region6: #{tpu_custom_call.1} parent=1 // loop_footer
      %s22 = sadd.s32 1, %s18
    $region7: #{tpu_custom_call.1} parent=1 // loop_footer_branch
      %17 = sbr.rel target = $region3
    $region8: #{tpu_custom_call.1} parent=1 // loop_exit
      _
    %1069 = vsyncpa [#allocation5], 1
    %s1070 = scalar_lea.sflag [#allocation5], 1
    %1071 = vsyncpa %s1070, 1

</llo_original>
